<compile_context>
chip_gen: v6e
topology: v6e:2x2x1
jax: 0.10.0
libtpu: 0.0.40
codegen_flags: <defaults>
</compile_context>

<pallas_src>
import math

import numpy as np
import jax
import jax.numpy as jnp
from jax.experimental import pallas as pl
from jax.experimental.pallas import tpu as pltpu


# ----------------------------------------------------------------------------
# Helpers
# ----------------------------------------------------------------------------
def _round_up(x: int, m: int) -> int:
    return ((x + m - 1) // m) * m


def _vmem_budget():
    """(tile-planning budget, compiler vmem limit) in bytes, chip-derived."""
    cap = 64 << 20                      # conservative default (v7x: 64 MiB / TC)
    try:
        cap = int(pltpu.get_tpu_info().vmem_capacity_bytes)
    except Exception:
        pass
    budget = min(int(cap * 0.60), 72 << 20)   # planning headroom for compiler temps
    limit = min(int(cap * 0.75), 96 << 20)    # explicit scoped-VMEM limit
    return budget, limit


def _gather_prod(idx_ref, fac_refs, b, n_idx, k):
    """prod_b = elementwise product of factors[i][indices[b, i], :]  -> (1, k).

    idx_ref is the flattened (B*n_idx,) SMEM scalar-prefetch vector; rows are
    read with dynamic sublane slices from factors resident in VMEM.
    """
    if not fac_refs:
        return jnp.ones((1, k), jnp.float32)
    prod = fac_refs[0][pl.ds(idx_ref[b * n_idx + 0], 1), :]
    for i in range(1, len(fac_refs)):
        prod = prod * fac_refs[i][pl.ds(idx_ref[b * n_idx + i], 1), :]
    return prod


# ----------------------------------------------------------------------------
# Kernels
# ----------------------------------------------------------------------------
def _make_action_kernel(n_idx, n_inner, use_scratch, k):
    """Action path, nA >= 2.  Grid = (row_tiles_of_A, samples).

    refs: [indexed factors (d_i,k)], A tile (t1,k), [inner^T (k,d_i)],
          out (1,t1,rest), [KR scratch (k,rest) if n_inner >= 2].
    Per step: tiny VPU prod + fold into the A tile, then ONE MXU matmul.
    """

    def kernel(idx_ref, *refs):
        fac_refs = refs[:n_idx]
        a_ref = refs[n_idx]
        inner_refs = refs[n_idx + 1:n_idx + 1 + n_inner]
        o_ref = refs[n_idx + 1 + n_inner]
        b = pl.program_id(1)

        if use_scratch:
            kr_ref = refs[n_idx + n_inner + 2]

            @pl.when((pl.program_id(0) == 0) & (b == 0))
            def _build_kr():
                # Khatri-Rao of the inner factors, built exactly once, stored
                # (k, rest): contraction dim leading -> MXU-native RHS, no
                # per-step rebuild or transpose.
                kr = inner_refs[0][...]
                for f_ref in inner_refs[1:]:
                    f = f_ref[...]
                    r, d = kr.shape[1], f.shape[1]
                    kr = (kr[:, :, None] * f[:, None, :]).reshape(k, r * d)
                kr_ref[...] = kr

            kr_mat = kr_ref[...]
        else:
            kr_mat = inner_refs[0][...]            # nA == 2: KR inner == factor^T

        prod = _gather_prod(idx_ref, fac_refs, b, n_idx, k)   # (1, k)
        scaled = a_ref[...] * prod                            # fold prod into A tile
        o_ref[...] = jax.lax.dot_general(
            scaled, kr_mat,
            dimension_numbers=(((1,), (0,)), ((), ())),       # (t1,k) @ (k,rest)
            preferred_element_type=jnp.float32,
        )[None, :, :]

    return kernel


def _make_matvec_kernel(n_idx, k):
    """Action path, nA == 1: out tile (1,1,t1) = prod (1,k) @ A^T tile (k,t1)."""

    def kernel(idx_ref, *refs):
        fac_refs = refs[:n_idx]
        at_ref = refs[n_idx]                       # (k, t1) column tile of A^T
        o_ref = refs[n_idx + 1]                    # (1, 1, t1)
        b = pl.program_id(1)
        prod = _gather_prod(idx_ref, fac_refs, b, n_idx, k)
        o_ref[...] = jax.lax.dot_general(
            prod, at_ref[...],
            dimension_numbers=(((1,), (0,)), ((), ())),
            preferred_element_type=jnp.float32,
        )[None, :, :]

    return kernel


def _make_sum_kernel(n_idx, k):
    """Fully-indexed path: one scalar per sample, grid = (B,)."""

    def kernel(idx_ref, *refs):
        fac_refs = refs[:n_idx]
        o_ref = refs[n_idx]                        # (1, 1, 1)
        b = pl.program_id(0)
        prod = _gather_prod(idx_ref, fac_refs, b, n_idx, k)
        o_ref[...] = jnp.sum(prod, axis=1, keepdims=True)[None]

    return kernel


# ----------------------------------------------------------------------------
# Wrappers
# ----------------------------------------------------------------------------
def parafac_forward_batch(factors, indices, nA):
    """Batched PARAFAC forward.

    factors: list of (d_i, k) arrays; indices: (B, n_idx) ints.
    Returns (B, D) for the action path, (B,) for the fully-indexed path.
    """
    factors = [jnp.asarray(f, jnp.float32) for f in factors]
    n_factors = len(factors)
    k = int(factors[0].shape[1])

    idx = np.asarray(indices)
    if idx.ndim == 1:
        idx = idx[None, :]
    B, n_idx = int(idx.shape[0]), int(idx.shape[1])
    # Flattened 1-D index vector in SMEM (avoids 2-D SMEM padding blowup).
    idx_host = idx.reshape(-1) if n_idx > 0 else np.zeros((B,), np.int32)
    idx_dev = jnp.asarray(idx_host, dtype=jnp.int32)

    indexed = list(factors[:n_idx])
    budget, vmem_limit = _vmem_budget()
    fixed_indexed = 8 * sum(int(f.shape[0]) * k for f in indexed)  # 2 bufs x 4 B

    # ---------------- fully-indexed path: one scalar per sample ----------------
    if n_idx == n_factors:
        in_specs = [pl.BlockSpec(tuple(f.shape), lambda b, idx_ref: (0, 0))
                    for f in indexed]
        out = pl.pallas_call(
            _make_sum_kernel(n_idx, k),
            out_shape=jax.ShapeDtypeStruct((B, 1, 1), jnp.float32),
            grid_spec=pltpu.PrefetchScalarGridSpec(
                num_scalar_prefetch=1, grid=(B,),
                in_specs=in_specs,
                out_specs=pl.BlockSpec((1, 1, 1), lambda b, idx_ref: (b, 0, 0))),
            compiler_params=pltpu.CompilerParams(
                dimension_semantics=("arbitrary",),
                vmem_limit_bytes=vmem_limit),
        )(idx_dev, *indexed)
        return out[:, 0, 0]

    # ---------------- action path ----------------
    kr_factors = factors[n_factors - nA:]
    a = kr_factors[0]
    inner = kr_factors[1:]
    d_outer = int(a.shape[0])

    if nA == 1:
        # out[b, :] = A @ prod_b : stream MXU-native column tiles of A^T (k, d);
        # output (B, 1, d_pad) keeps d on lanes (lane-dense, >=128 wide stores).
        d_pad = _round_up(d_outer, 128)
        per_col = 2 * 4 * (k + 1)              # A^T tile + out tile, double-buffered
        avail = budget - fixed_indexed
        if avail < d_pad * per_col:
            t1 = max(128, (avail // per_col) // 128 * 128)
            if t1 >= 512:
                t1 = t1 // 256 * 256           # 256-aligned for the v6e/v7x MXU
            d_pad = _round_up(d_outer, t1)
        else:
            t1 = d_pad
        at = a.T
        if d_pad != d_outer:
            at = jnp.pad(at, ((0, 0), (0, d_pad - d_outer)))
        grid = (d_pad // t1, B)                # A^T tile resident across samples

        in_specs = [pl.BlockSpec(tuple(f.shape), lambda m, b, idx_ref: (0, 0))
                    for f in indexed]
        in_specs.append(pl.BlockSpec((k, t1), lambda m, b, idx_ref: (0, m)))
        out = pl.pallas_call(
            _make_matvec_kernel(n_idx, k),
            out_shape=jax.ShapeDtypeStruct((B, 1, d_pad), jnp.float32),
            grid_spec=pltpu.PrefetchScalarGridSpec(
                num_scalar_prefetch=1, grid=grid,
                in_specs=in_specs,
                out_specs=pl.BlockSpec((1, 1, t1), lambda m, b, idx_ref: (b, 0, m))),
            compiler_params=pltpu.CompilerParams(
                dimension_semantics=("parallel", "parallel"),
                vmem_limit_bytes=vmem_limit),
        )(idx_dev, *indexed, at)
        return out[:, 0, :d_outer]

    # nA >= 2: stream row tiles of A = factors[-nA]; inner KR stays resident.
    n_inner = len(inner)
    inner_dims = [int(f.shape[0]) for f in inner]
    d_last = inner_dims[-1]
    rest_mid = 1
    for d in inner_dims[:-1]:
        rest_mid *= d
    # Lane-density pad: make `rest` a multiple of 128 so output stores are
    # unmasked full vregs (biggest measured store-side lever).
    need = 128 // math.gcd(rest_mid, 128)
    d_last_pad = _round_up(d_last, need)
    rest_pad = rest_mid * d_last_pad

    inner_t = [f.T for f in inner]            # (k, d_i): MXU-native RHS layout
    if d_last_pad != d_last:
        inner_t[-1] = jnp.pad(inner_t[-1], ((0, 0), (0, d_last_pad - d_last)))

    use_scratch = n_inner >= 2

    # VMEM accounting: resident indexed + inner factors (2 bufs each), KR scratch
    # + its build temp, plus double-buffered streamed A-tile and out-tile rows.
    fixed = fixed_indexed + 8 * sum(k * int(ft.shape[1]) for ft in inner_t)
    if use_scratch:
        fixed += 2 * 4 * k * rest_pad
    per_row = 2 * 4 * (k + rest_pad)
    avail = budget - fixed
    d8 = _round_up(d_outer, 8)
    if avail >= d8 * per_row:
        t1 = d8                                # whole A fits -> single row tile
    else:
        t1 = max(8, avail // per_row)
        if t1 >= 512:
            t1 = t1 // 256 * 256               # 256-aligned for the v6e/v7x MXU
        else:
            t1 = max(8, t1 // 8 * 8)
    d_pad = _round_up(d_outer, t1)
    a_p = jnp.pad(a, ((0, d_pad - d_outer), (0, 0))) if d_pad != d_outer else a
    grid = (d_pad // t1, B)                    # A tile resident across samples

    in_specs = [pl.BlockSpec(tuple(f.shape), lambda m, b, idx_ref: (0, 0))
                for f in indexed]
    in_specs.append(pl.BlockSpec((t1, k), lambda m, b, idx_ref: (m, 0)))
    for ft in inner_t:
        in_specs.append(pl.BlockSpec(tuple(ft.shape), lambda m, b, idx_ref: (0, 0)))
    scratch = [pltpu.VMEM((k, rest_pad), jnp.float32)] if use_scratch else []
    # With the first-step KR build the whole grid must stay on one TensorCore
    # (a "parallel" axis on v7x would read an uninitialized scratch on TC1).
    semantics = ("arbitrary", "arbitrary") if use_scratch else ("parallel", "parallel")

    out = pl.pallas_call(
        _make_action_kernel(n_idx, n_inner, use_scratch, k),
        out_shape=jax.ShapeDtypeStruct((B, d_pad, rest_pad), jnp.float32),
        grid_spec=pltpu.PrefetchScalarGridSpec(
            num_scalar_prefetch=1, grid=grid,
            in_specs=in_specs,
            out_specs=pl.BlockSpec((1, t1, rest_pad), lambda m, b, idx_ref: (b, m, 0)),
            scratch_shapes=scratch),
        compiler_params=pltpu.CompilerParams(
            dimension_semantics=semantics, vmem_limit_bytes=vmem_limit),
    )(idx_dev, *indexed, a_p, *inner_t)

    # Strip the zero padding (d_outer rows, last-factor columns) and flatten.
    out = out[:, :d_outer, :].reshape(B, d_outer, rest_mid, d_last_pad)[:, :, :, :d_last]
    return out.reshape(B, d_outer * rest_mid * d_last)


def parafac_forward(factors, indices, nA):
    """Single index tuple (module-parity): returns (D,) for the action path,
    a scalar for the fully-indexed path."""
    out = parafac_forward_batch(factors, np.asarray(indices).reshape(1, -1), nA)
    return out[0]


# ----------------------------------------------------------------------------
# Pure-JAX reference (mirrors the PyTorch forward exactly, in f32)
# ----------------------------------------------------------------------------
def parafac_ref(factors, indices, nA):
    factors = [jnp.asarray(f, jnp.float32) for f in factors]
    k = factors[0].shape[1]
    prod = jnp.ones((k,), jnp.float32)
    for i in range(len(indices)):
        prod = prod * factors[i][int(indices[i]), :]
    if len(indices) < len(factors):
        kr = factors[len(factors) - nA]
        for a in range(1, nA):
            f = factors[len(factors) - nA + a]
            d1, d2 = kr.shape[0], f.shape[0]
            kr = (kr[:, None, :] * f[None, :, :]).reshape(d1 * d2, k)
        return kr @ prod
    return jnp.sum(prod)


# ----------------------------------------------------------------------------
if __name__ == "__main__":
    key = jax.random.PRNGKey(0)

    # PARAFAC(dims, k, scale, nA, bias) -- deterministic synthetic parameters
    dims = [8, 16, 16, 16]
    k = 128
    scale, bias = 1.0, 0.0

    keys = jax.random.split(key, len(dims))
    factors = [scale * (jax.random.normal(kk, (d, k), dtype=jnp.float32) - bias)
               for kk, d in zip(keys, dims)]

    def ref_batch(idx2d, nA_):
        return np.stack([np.asarray(parafac_ref(factors, idx2d[i], nA_))
                         for i in range(idx2d.shape[0])])

    tol = dict(rtol=2e-3, atol=2e-3)

    # 1) batched action, nA=2 (KR of last two factors), 4 index tuples per call
    idx2 = np.array([[3, 5], [0, 1], [7, 15], [2, 9]], dtype=np.int32)
    out2 = jax.block_until_ready(parafac_forward_batch(factors, idx2, 2))
    assert out2.shape == (4, 16 * 16), out2.shape
    np.testing.assert_allclose(np.asarray(out2), ref_batch(idx2, 2), **tol)

    # 2) single-sample parity with the PyTorch module forward, nA=2
    out_single = jax.block_until_ready(parafac_forward(factors, np.array([3, 5]), 2))
    np.testing.assert_allclose(
        np.asarray(out_single),
        np.asarray(parafac_ref(factors, np.array([3, 5]), 2)), **tol)

    # 3) nA=1 action path (streamed A^T matvec), 2 samples
    idx1 = np.array([[1, 2, 3], [7, 0, 5]], dtype=np.int32)
    out1 = jax.block_until_ready(parafac_forward_batch(factors, idx1, 1))
    assert out1.shape == (2, 16), out1.shape
    np.testing.assert_allclose(np.asarray(out1), ref_batch(idx1, 1), **tol)

    # 4) nA=3 action path (in-kernel Khatri-Rao build into VMEM scratch), 2 samples
    idx3 = np.array([[2], [6]], dtype=np.int32)
    out3 = jax.block_until_ready(parafac_forward_batch(factors, idx3, 3))
    assert out3.shape == (2, 16 * 16 * 16), out3.shape
    np.testing.assert_allclose(np.asarray(out3), ref_batch(idx3, 3), **tol)

    # 5) fully-indexed path (scalar per sample), 3 samples
    idxf = np.array([[3, 5, 7, 9], [0, 0, 0, 0], [7, 15, 15, 15]], dtype=np.int32)
    outf = jax.block_until_ready(parafac_forward_batch(factors, idxf, 2))
    assert outf.shape == (3,), outf.shape
    np.testing.assert_allclose(np.asarray(outf), ref_batch(idxf, 2), **tol)

    # 6) empty index tuple (prod == ones), nA=2
    idx0 = np.zeros((2, 0), dtype=np.int32)
    out0 = jax.block_until_ready(parafac_forward_batch(factors, idx0, 2))
    assert out0.shape == (2, 16 * 16), out0.shape
    np.testing.assert_allclose(np.asarray(out0), ref_batch(idx0, 2), **tol)

    print("KERNEL_OK")
</pallas_src>

<mosaic_0001>
module attributes {stable_mosaic.version = 11 : i64} {
  func.func @kernel(%arg0: i32, %arg1: i32, %arg2: memref<8xi32, #tpu.memory_space<smem>>, %arg3: memref<8x128xf32, #tpu.memory_space<vmem>>, %arg4: memref<16x128xf32, #tpu.memory_space<vmem>>, %arg5: memref<16x128xf32, #tpu.memory_space<vmem>>, %arg6: memref<128x128xf32, #tpu.memory_space<vmem>>, %arg7: memref<1x16x128xf32, #tpu.memory_space<vmem>>) attributes {dimension_semantics = [#tpu.dimension_semantics<parallel>, #tpu.dimension_semantics<parallel>], iteration_bounds = array<i64: 1, 4>, scalar_prefetch = 1 : i64, scratch_operands = 0 : i64, tpu.core_type = #tpu.core_type<tc>, window_params = [{pipeline_mode = #tpu.pipeline_mode<synchronous>, transform_indices = @transform_0, window_bounds = array<i64: 8, 128>}, {pipeline_mode = #tpu.pipeline_mode<synchronous>, transform_indices = @transform_1, window_bounds = array<i64: 16, 128>}, {transform_indices = @transform_2, window_bounds = array<i64: 16, 128>}, {pipeline_mode = #tpu.pipeline_mode<synchronous>, transform_indices = @transform_3, window_bounds = array<i64: 128, 128>}, {transform_indices = @transform_4, window_bounds = array<i64: 1, 16, 128>}]} {
    %c0 = arith.constant 0 : index
    %c0_0 = arith.constant 0 : index
    %0 = vector.load %arg6[%c0, %c0_0] : memref<128x128xf32, #tpu.memory_space<vmem>>, vector<128x128xf32>
    %c2_i32 = arith.constant 2 : i32
    %1 = arith.muli %arg1, %c2_i32 : i32
    %c0_i32 = arith.constant 0 : i32
    %2 = arith.addi %1, %c0_i32 : i32
    %3 = arith.index_cast %2 : i32 to index
    %4 = memref.load %arg2[%3] : memref<8xi32, #tpu.memory_space<smem>>
    %5 = arith.index_cast %4 : i32 to index
    %c0_1 = arith.constant 0 : index
    %6 = vector.load %arg3[%5, %c0_1] : memref<8x128xf32, #tpu.memory_space<vmem>>, vector<1x128xf32>
    %c2_i32_2 = arith.constant 2 : i32
    %7 = arith.muli %arg1, %c2_i32_2 : i32
    %c1_i32 = arith.constant 1 : i32
    %8 = arith.addi %7, %c1_i32 : i32
    %9 = arith.index_cast %8 : i32 to index
    %10 = memref.load %arg2[%9] : memref<8xi32, #tpu.memory_space<smem>>
    %11 = arith.index_cast %10 : i32 to index
    %c0_3 = arith.constant 0 : index
    %12 = vector.load %arg4[%11, %c0_3] : memref<16x128xf32, #tpu.memory_space<vmem>>, vector<1x128xf32>
    %13 = arith.mulf %6, %12 : vector<1x128xf32>
    %c0_4 = arith.constant 0 : index
    %c0_5 = arith.constant 0 : index
    %14 = vector.load %arg5[%c0_4, %c0_5] : memref<16x128xf32, #tpu.memory_space<vmem>>, vector<16x128xf32>
    %15 = vector.broadcast %13 : vector<1x128xf32> to vector<16x128xf32>
    %16 = arith.mulf %14, %15 : vector<16x128xf32>
    %cst = arith.constant dense<0.000000e+00> : vector<16x128xf32>
    %17 = tpu.matmul %16, %0, %cst {dimension_numbers = #tpu.dot_dimension_numbers<[1], [0], [0], [1], [0, 0, 1, 1], [], []>} : vector<16x128xf32>, vector<128x128xf32>, vector<16x128xf32> -> vector<16x128xf32>
    %18 = vector.shape_cast %17 : vector<16x128xf32> to vector<1x16x128xf32>
    %c0_6 = arith.constant 0 : index
    %c0_7 = arith.constant 0 : index
    %c0_8 = arith.constant 0 : index
    %19 = vector.load %arg7[%c0_6, %c0_7, %c0_8] : memref<1x16x128xf32, #tpu.memory_space<vmem>>, vector<1x16x128xf32>
    tpu.vector_store %arg7[%c0_6, %c0_7, %c0_8], %18 {strides = array<i32>} : memref<1x16x128xf32, #tpu.memory_space<vmem>>, vector<1x16x128xf32>,
    return
  }
  func.func @transform_0(%arg0: i32, %arg1: i32, %arg2: memref<8xi32, #tpu.memory_space<smem>>) -> (i32, i32) {
    %c0_i32 = arith.constant 0 : i32
    %c0_i32_0 = arith.constant 0 : i32
    %c0_i32_1 = arith.constant 0 : i32
    return %c0_i32, %c0_i32_0 : i32, i32
  }
  func.func @transform_1(%arg0: i32, %arg1: i32, %arg2: memref<8xi32, #tpu.memory_space<smem>>) -> (i32, i32) {
    %c0_i32 = arith.constant 0 : i32
    %c0_i32_0 = arith.constant 0 : i32
    %c0_i32_1 = arith.constant 0 : i32
    return %c0_i32, %c0_i32_0 : i32, i32
  }
  func.func @transform_2(%arg0: i32, %arg1: i32, %arg2: memref<8xi32, #tpu.memory_space<smem>>) -> (i32, i32) {
    %c0_i32 = arith.constant 0 : i32
    %c0_i32_0 = arith.constant 0 : i32
    return %arg0, %c0_i32 : i32, i32
  }
  func.func @transform_3(%arg0: i32, %arg1: i32, %arg2: memref<8xi32, #tpu.memory_space<smem>>) -> (i32, i32) {
    %c0_i32 = arith.constant 0 : i32
    %c0_i32_0 = arith.constant 0 : i32
    %c0_i32_1 = arith.constant 0 : i32
    return %c0_i32, %c0_i32_0 : i32, i32
  }
  func.func @transform_4(%arg0: i32, %arg1: i32, %arg2: memref<8xi32, #tpu.memory_space<smem>>) -> (i32, i32, i32) {
    %c0_i32 = arith.constant 0 : i32
    %c0_i32_0 = arith.constant 0 : i32
    return %arg1, %arg0, %c0_i32 : i32, i32, i32
  }
}

</mosaic_0001>

<llo_original>
// kernel: tpu_custom_call.1
$region0: #{tpu_custom_call.1}
  #allocation0 [shape = 'u32[]', space=smem, size = 0x4, offset = 0x4, fixed_abs, tag = 'smem constant byte address 0x4 - core index']
  #allocation1 [shape = 'u32[144,128]{1,0:T(1,128)}', space=vmem, size = 0x12000, scoped, tag = 'internal scratch']
  #allocation2 [shape = 's32[1]{0}', space=sflag, size = 0x4, scoped, tag = 'scoped memory for tpu_custom_call.1']
  #allocation3 [shape = 'u8[512]{0}', space=smem, size = 0x200, scoped, tag = 'prefetched SMEM operand 0']
  %s0 = inlined_call_operand.hbm [shape: s32[8], index: 0, kind: input, shape index: {}]
  %s1 = inlined_call_operand.hbm [shape: f32[8,128], index: 1, kind: input, shape index: {}]
  %s2 = inlined_call_operand.hbm [shape: f32[16,128], index: 2, kind: input, shape index: {}]
  %s3 = inlined_call_operand.hbm [shape: f32[16,128], index: 3, kind: input, shape index: {}]
  %s4 = inlined_call_operand.hbm [shape: f32[128,128], index: 4, kind: input, shape index: {}]
  %s5 = inlined_call_operand.hbm [shape: f32[4,16,128], index: 5, kind: output, shape index: {}]
  %s6 = sld [smem:[#allocation0]]
  $region65: #{tpu_custom_call.1} parent=0
    _
  %s8 = ssub.s32 1, %s6
  %s9 = scalar_select 0, %s8, %s6
  %11 = dma.hbm_to_smem %s0, 16, [#allocation3], [#allocation2]
  %12 = dma.done [#allocation2], 16
  %13 = sfence
  $region1: #{tpu_custom_call.1} parent=0
    #allocation4 [shape = 'u8[4096]{0}', space=vmem, size = 0x1000, scoped, tag = 'input window, operand 1, single buffered']
    #allocation5 [shape = 's32[2]{0}', space=sflag, size = 0x8, scoped, tag = 'scoped memory for tpu_custom_call.1']
    #allocation6 [shape = 's32[2]{0}', space=sflag, size = 0x8, scoped, tag = 'scoped memory for tpu_custom_call.1']
    #allocation7 [shape = 'u8[8192]{0}', space=vmem, size = 0x2000, scoped, tag = 'input window, operand 2, single buffered']
    #allocation8 [shape = 's32[1]{0}', space=sflag, size = 0x4, scoped, tag = 'scoped memory for tpu_custom_call.1']
    #allocation9 [shape = 'u8[8192]{0}', space=vmem, size = 0x2000, scoped, tag = 'input window, operand 3, single buffered']
    #allocation10 [shape = 'u8[65536]{0}', space=vmem, size = 0x10000, scoped, tag = 'input window, operand 4, single buffered']
    #allocation11 [shape = 's32[1]{0}', space=sflag, size = 0x4, scoped, tag = 'scoped memory for tpu_custom_call.1']
    #allocation12 [shape = 'u8[16384]{0}', space=vmem, size = 0x4000, scoped, tag = 'output window, operand 0']
    %14 = vsyncpa [#allocation5], 0
    %15 = vsyncpa [#allocation8], 0
    %16 = vsyncpa [#allocation11], 0
    %17 = vsyncpa [#allocation6], 0
    %s18 = scalar_lea.sflag [#allocation6], 1
    %19 = vsyncpa %s18, 0
    loop: start=0, step=1, limit=6
    $region2: #{tpu_custom_call.1} parent=1 // loop_pre_header
      _
    $region3: #{tpu_custom_call.1} parent=1 // loop_header
      %s21 = sphi 0, %s25
      %p22 = scmp.ge.s32.totalorder %s21, 6
      %s28 = sphi 0, %s40
      %s29 = sphi 0, %s36
      %s30 = sphi 0, %s28
      %s31 = sphi 0, %s29
      %s32 = sphi 0, %s30
      %s33 = sphi 0, %s31
      %s41 = sphi 0, %s41
      %s43 = sphi 0, %s41
      %s44 = sphi 0, %s43
      %s58 = sphi 0, %s44
      %s62 = sphi 0, %s62
      %s64 = sphi 0, %s62
      %s65 = sphi 0, %s64
      %s79 = sphi 0, %s65
      %s85 = sphi 0, %s87
      %s88 = sphi 0, %s85
      %s89 = sphi 0, %s88
      %s105 = sphi 0, %s89
      %s109 = sphi 0, %s109
      %s111 = sphi 0, %s109
      %s112 = sphi 0, %s111
      %s126 = sphi 0, %s112
      %s134 = sphi 0, %s136
      %s137 = sphi 0, %s134
      %s138 = sphi 0, %s137
      %s154 = sphi 0, %s138
    $region4: #{tpu_custom_call.1} parent=1 // loop_header_branch
      %24 = sbr.rel (%p22) target = $region8
    $region5: #{tpu_custom_call.1} parent=1 // loop_body
      %s26 = ssub.s32 %s21, 1
      %s27 = ssub.s32 %s21, 2
      %s34 = sadd.s32 1, %s29
      %p35 = scmp.ge.s32.totalorder %s34, 4
      %s36 = scalar_select %p35, 0, %s34
      %s37 = sadd.s32 1, %s28
      %s38 = scalar_select %p35, %s37, %s28
      %p39 = scmp.ge.s32.totalorder %s38, 1
      %s40 = scalar_select %p39, 0, %s38
      %s42 = sadd.s32 %s41, 1
      %p45 = scmp.eq.s32.totalorder %s21, 3
      %p46 = scmp.ne.s32.totalorder %s41, %s43
      %p47 = scmp.eq.s32.totalorder %s21, 0
      %p48 = por %p46, %p47
      %p49 = scmp.ne.s32.totalorder %s41, %s43
      %p50 = scmp.eq.s32.totalorder %s26, 3
      %p51 = por %p49, %p50
      %p52 = scmp.ne.s32.totalorder %s43, %s44
      %p53 = scmp.eq.s32.totalorder %s26, 0
      %p54 = por %p52, %p53
      %p55 = scmp.ne.s32.totalorder %s43, %s44
      %p56 = scmp.eq.s32.totalorder %s27, 3
      %p57 = por %p55, %p56
      %p59 = scmp.ne.s32.totalorder %s44, %s58
      %p60 = scmp.eq.s32.totalorder %s27, 0
      %p61 = por %p59, %p60
      %s63 = sadd.s32 %s62, 1
      %p66 = scmp.eq.s32.totalorder %s21, 3
      %p67 = scmp.ne.s32.totalorder %s62, %s64
      %p68 = scmp.eq.s32.totalorder %s21, 0
      %p69 = por %p67, %p68
      %p70 = scmp.ne.s32.totalorder %s62, %s64
      %p71 = scmp.eq.s32.totalorder %s26, 3
      %p72 = por %p70, %p71
      %p73 = scmp.ne.s32.totalorder %s64, %s65
      %p74 = scmp.eq.s32.totalorder %s26, 0
      %p75 = por %p73, %p74
      %p76 = scmp.ne.s32.totalorder %s64, %s65
      %p77 = scmp.eq.s32.totalorder %s27, 3
      %p78 = por %p76, %p77
      %p80 = scmp.ne.s32.totalorder %s65, %s79
      %p81 = scmp.eq.s32.totalorder %s27, 0
      %p82 = por %p80, %p81
      %s83 = ssub.s32 %s28, %s40
      %p84 = scmp.eq.s32.totalorder %s83, 0
      %s86 = sadd.s32 %s85, 1
      %s87 = scalar_select %p84, %s85, %s86
      %p90 = pneg %p84
      %p91 = scmp.eq.s32.totalorder %s21, 3
      %p92 = por %p90, %p91
      %p93 = scmp.ne.s32.totalorder %s85, %s88
      %p94 = scmp.eq.s32.totalorder %s21, 0
      %p95 = por %p93, %p94
      %p96 = scmp.ne.s32.totalorder %s85, %s88
      %p97 = scmp.eq.s32.totalorder %s26, 3
      %p98 = por %p96, %p97
      %p99 = scmp.ne.s32.totalorder %s88, %s89
      %p100 = scmp.eq.s32.totalorder %s26, 0
      %p101 = por %p99, %p100
      %p102 = scmp.ne.s32.totalorder %s88, %s89
      %p103 = scmp.eq.s32.totalorder %s27, 3
      %p104 = por %p102, %p103
      %p106 = scmp.ne.s32.totalorder %s89, %s105
      %p107 = scmp.eq.s32.totalorder %s27, 0
      %p108 = por %p106, %p107
      %s110 = sadd.s32 %s109, 1
      %p113 = scmp.eq.s32.totalorder %s21, 3
      %p114 = scmp.ne.s32.totalorder %s109, %s111
      %p115 = scmp.eq.s32.totalorder %s21, 0
      %p116 = por %p114, %p115
      %p117 = scmp.ne.s32.totalorder %s109, %s111
      %p118 = scmp.eq.s32.totalorder %s26, 3
      %p119 = por %p117, %p118
      %p120 = scmp.ne.s32.totalorder %s111, %s112
      %p121 = scmp.eq.s32.totalorder %s26, 0
      %p122 = por %p120, %p121
      %p123 = scmp.ne.s32.totalorder %s111, %s112
      %p124 = scmp.eq.s32.totalorder %s27, 3
      %p125 = por %p123, %p124
      %p127 = scmp.ne.s32.totalorder %s112, %s126
      %p128 = scmp.eq.s32.totalorder %s27, 0
      %p129 = por %p127, %p128
      %s130 = ssub.s32 %s29, %s36
      %s131 = ssub.s32 %s28, %s40
      %s132 = sor.u32 %s130, %s131
      %p133 = scmp.eq.s32.totalorder %s132, 0
      %s135 = sadd.s32 %s134, 1
      %s136 = scalar_select %p133, %s134, %s135
      %p139 = pneg %p133
      %p140 = scmp.eq.s32.totalorder %s21, 3
      %p141 = por %p139, %p140
      %p142 = scmp.ne.s32.totalorder %s134, %s137
      %p143 = scmp.eq.s32.totalorder %s21, 0
      %p144 = por %p142, %p143
      %p145 = scmp.ne.s32.totalorder %s134, %s137
      %p146 = scmp.eq.s32.totalorder %s26, 3
      %p147 = por %p145, %p146
      %p148 = scmp.ne.s32.totalorder %s137, %s138
      %p149 = scmp.eq.s32.totalorder %s26, 0
      %p150 = por %p148, %p149
      %p151 = scmp.ne.s32.totalorder %s137, %s138
      %p152 = scmp.eq.s32.totalorder %s27, 3
      %p153 = por %p151, %p152
      %p155 = scmp.ne.s32.totalorder %s138, %s154
      %p156 = scmp.eq.s32.totalorder %s27, 0
      %p157 = por %p155, %p156
      %p158 = scmp.le.s32.totalorder 1, %s21
      %p159 = scmp.lt.s32.totalorder %s21, 5
      %p160 = pnand %p158, %p159
      %p161 = pneg %p160
      // Predicated region
      $region9: #{tpu_custom_call.1} parent=5 // pred_check
        _
      $region10: #{tpu_custom_call.1} parent=5 // pred_check_branch
        %163 = sbr.rel (%p160) target = $region12
      $region11: #{tpu_custom_call.1} parent=5 // pred_region
        %s164 = ssub.s32 %s21, 1
        // Predicated region
        $region13: #{tpu_custom_call.1} parent=11 // pred_check
          %p165 = pneg %p54
        $region14: #{tpu_custom_call.1} parent=11 // pred_check_branch
          %167 = sbr.rel (%p165) target = $region16
        $region15: #{tpu_custom_call.1} parent=11 // pred_region
          %s169 = ssub.s32 128, 128
          %170 = vsyncadd [#allocation5], %s169
          %s172 = sshll.u32 [#allocation4], 4
          %s173 = int_to_ptr.vmem [resolvable:$true] %s172
          %175 = dma.hbm_to_vmem [thread:$0]  %s1, 128, %s173, [#allocation5]
        $region16: #{tpu_custom_call.1} parent=11 // pred_fallthru
          _
        // Predicated region
        $region17: #{tpu_custom_call.1} parent=11 // pred_check
          %p176 = pneg %p75
        $region18: #{tpu_custom_call.1} parent=11 // pred_check_branch
          %178 = sbr.rel (%p176) target = $region20
        $region19: #{tpu_custom_call.1} parent=11 // pred_region
          %s180 = ssub.s32 256, 256
          %181 = vsyncadd [#allocation8], %s180
          %s182 = sshll.u32 [#allocation7], 4
          %s183 = int_to_ptr.vmem [resolvable:$true] %s182
          %188 = dma.hbm_to_vmem [thread:$0]  %s2, 256, %s183, [#allocation8], 128, 128, 8
        $region20: #{tpu_custom_call.1} parent=11 // pred_fallthru
          _
        // Predicated region
        $region21: #{tpu_custom_call.1} parent=11 // pred_check
          %p189 = pneg %p101
        $region22: #{tpu_custom_call.1} parent=11 // pred_check_branch
          %191 = sbr.rel (%p189) target = $region24
        $region23: #{tpu_custom_call.1} parent=11 // pred_region
          %s192 = smul.u32 2, %s30
          %s194 = ssub.s32 256, 256
          %195 = vsyncadd [#allocation8], %s194
          %s196 = smul.addr %s192, 128
          %s197 = scalar_lea.hbm %s3, %s196
          %s198 = sshll.u32 [#allocation9], 4
          %s199 = int_to_ptr.vmem [resolvable:$true] %s198
          %204 = dma.hbm_to_vmem [thread:$0]  %s197, 256, %s199, [#allocation8], 128, 128, 8
        $region24: #{tpu_custom_call.1} parent=11 // pred_fallthru
          _
        // Predicated region
        $region25: #{tpu_custom_call.1} parent=11 // pred_check
          %p205 = pneg %p122
        $region26: #{tpu_custom_call.1} parent=11 // pred_check_branch
          %207 = sbr.rel (%p205) target = $region28
        $region27: #{tpu_custom_call.1} parent=11 // pred_region
          %s209 = ssub.s32 2048, 2048
          %210 = vsyncadd [#allocation11], %s209
          %s211 = sshll.u32 [#allocation10], 4
          %s212 = int_to_ptr.vmem [resolvable:$true] %s211
          %217 = dma.hbm_to_vmem [thread:$0]  %s4, 2048, %s212, [#allocation11], 128, 128, 8
        $region28: #{tpu_custom_call.1} parent=11 // pred_fallthru
          _
      $region12: #{tpu_custom_call.1} parent=5 // pred_fallthru
        _
      %p218 = scmp.lt.s32.totalorder %s21, 4
      // Predicated region
      $region29: #{tpu_custom_call.1} parent=5 // pred_check
        %p219 = pneg %p218
      $region30: #{tpu_custom_call.1} parent=5 // pred_check_branch
        %221 = sbr.rel (%p219) target = $region32
      $region31: #{tpu_custom_call.1} parent=5 // pred_region
        _
      $region32: #{tpu_custom_call.1} parent=5 // pred_fallthru
        _
      %p222 = scmp.le.s32.totalorder 1, %s21
      %p223 = scmp.lt.s32.totalorder %s21, 5
      %p224 = pnand %p222, %p223
      %p225 = pneg %p224
      // Predicated region
      $region33: #{tpu_custom_call.1} parent=5 // pred_check
        _
      $region34: #{tpu_custom_call.1} parent=5 // pred_check_branch
        %227 = sbr.rel (%p224) target = $region36
      $region35: #{tpu_custom_call.1} parent=5 // pred_region
        %s228 = ssub.s32 %s21, 1
        // Predicated region
        $region37: #{tpu_custom_call.1} parent=35 // pred_check
          %p229 = pneg %p54
        $region38: #{tpu_custom_call.1} parent=35 // pred_check_branch
          %231 = sbr.rel (%p229) target = $region40
        $region39: #{tpu_custom_call.1} parent=35 // pred_region
          %232 = dma.done [#allocation5], 128
        $region40: #{tpu_custom_call.1} parent=35 // pred_fallthru
          _
        // Predicated region
        $region41: #{tpu_custom_call.1} parent=35 // pred_check
          %p233 = pneg %p75
        $region42: #{tpu_custom_call.1} parent=35 // pred_check_branch
          %235 = sbr.rel (%p233) target = $region44
        $region43: #{tpu_custom_call.1} parent=35 // pred_region
          %236 = dma.done [#allocation8], 256
        $region44: #{tpu_custom_call.1} parent=35 // pred_fallthru
          _
        // Predicated region
        $region45: #{tpu_custom_call.1} parent=35 // pred_check
          %p237 = pneg %p101
        $region46: #{tpu_custom_call.1} parent=35 // pred_check_branch
          %239 = sbr.rel (%p237) target = $region48
        $region47: #{tpu_custom_call.1} parent=35 // pred_region
          %240 = dma.done [#allocation8], 256
        $region48: #{tpu_custom_call.1} parent=35 // pred_fallthru
          _
        // Predicated region
        $region49: #{tpu_custom_call.1} parent=35 // pred_check
          %p241 = pneg %p122
        $region50: #{tpu_custom_call.1} parent=35 // pred_check_branch
          %243 = sbr.rel (%p241) target = $region52
        $region51: #{tpu_custom_call.1} parent=35 // pred_region
          %244 = dma.done [#allocation11], 2048
        $region52: #{tpu_custom_call.1} parent=35 // pred_fallthru
          _
        %p245 = pneg %p54
        %p246 = pneg %p51
        %p247 = pneg %p75
        %p248 = pneg %p72
        %p249 = pneg %p101
        %p250 = pneg %p98
        %p251 = pneg %p122
        %p252 = pneg %p119
        %p253 = pneg %p150
        %p254 = pneg %p147
        %s255 = sand.u32 %s137, 1
        %s256 = scalar_lea.sflag [#allocation6], %s255
        %s257 = sand.u32 %s137, 1
        %s258 = smul.addr %s257, 16
        %s259 = scalar_lea.vmem [#allocation12], %s258
        %s260 = smul.u32 2, %s30
        %s261 = smul.u32 2, %s30
        %v262 = vld [vmem:[#allocation10] sm:$0xff]
        %v263 = vld [vmem:[#allocation10 + $0x8] sm:$0xff]
        %v264 = vld [vmem:[#allocation10 + $0x10] sm:$0xff]
        %v265 = vld [vmem:[#allocation10 + $0x18] sm:$0xff]
        %v266 = vld [vmem:[#allocation10 + $0x20] sm:$0xff]
        %v267 = vld [vmem:[#allocation10 + $0x28] sm:$0xff]
        %v268 = vld [vmem:[#allocation10 + $0x30] sm:$0xff]
        %v269 = vld [vmem:[#allocation10 + $0x38] sm:$0xff]
        %v270 = vld [vmem:[#allocation10 + $0x40] sm:$0xff]
        %v271 = vld [vmem:[#allocation10 + $0x48] sm:$0xff]
        %v272 = vld [vmem:[#allocation10 + $0x50] sm:$0xff]
        %v273 = vld [vmem:[#allocation10 + $0x58] sm:$0xff]
        %v274 = vld [vmem:[#allocation10 + $0x60] sm:$0xff]
        %v275 = vld [vmem:[#allocation10 + $0x68] sm:$0xff]
        %v276 = vld [vmem:[#allocation10 + $0x70] sm:$0xff]
        %v277 = vld [vmem:[#allocation10 + $0x78] sm:$0xff]
        %s278 = smul.u32 %s31, 2
        %s279 = sld [smem:[#allocation3 + %s278]]
        %s280 = scalar_lea.vmem [#allocation4], %s279
        %v281 = vld [vmem:[%s280] sm:$0x1]
        %s282 = sadd.s32 %s278, 1
        %s283 = sld [smem:[#allocation3 + %s282]]
        %s284 = scalar_lea.vmem [#allocation7], %s283
        %v285 = vld [vmem:[%s284] sm:$0x1]
        %v286 = vmul.f32 %v281, %v285
        %v287 = vld [vmem:[#allocation9] sm:$0xff]
        %v288 = vld [vmem:[#allocation9 + $0x8] sm:$0xff]
        %v289 = vlaneseq
        %v290 = vshrl.u32 %v289, 7
        %v291 = vsub.s32 0, %v290
        %v292 = vrot.slane %v286, %v291
        %v293 = vmul.f32 %v287, %v292
        %v294 = vmul.f32 %v288, %v292
        %295 = vmatprep.subr.mxu0 0.0
        %296 = vmatpush1.msra.mxu0 %v277
        %297 = vmatprep.subr.mxu0 0.0
        %298 = vmatpush1.msra.mxu0 %v276
        %299 = vmatprep.subr.mxu0 0.0
        %300 = vmatpush1.msra.mxu0 %v275
        %301 = vmatprep.subr.mxu0 0.0
        %302 = vmatpush1.msra.mxu0 %v274
        %303 = vmatprep.subr.mxu0 0.0
        %304 = vmatpush1.msra.mxu0 %v273
        %305 = vmatprep.subr.mxu0 0.0
        %306 = vmatpush1.msra.mxu0 %v272
        %307 = vmatprep.subr.mxu0 0.0
        %308 = vmatpush1.msra.mxu0 %v271
        %309 = vmatprep.subr.mxu0 0.0
        %310 = vmatpush1.msra.mxu0 %v270
        %311 = vmatprep.subr.mxu0 0.0
        %312 = vmatpush1.msra.mxu0 %v269
        %313 = vmatprep.subr.mxu0 0.0
        %314 = vmatpush1.msra.mxu0 %v268
        %315 = vmatprep.subr.mxu0 0.0
        %316 = vmatpush1.msra.mxu0 %v267
        %317 = vmatprep.subr.mxu0 0.0
        %318 = vmatpush1.msra.mxu0 %v266
        %319 = vmatprep.subr.mxu0 0.0
        %320 = vmatpush1.msra.mxu0 %v265
        %321 = vmatprep.subr.mxu0 0.0
        %322 = vmatpush1.msra.mxu0 %v264
        %323 = vmatprep.subr.mxu0 0.0
        %324 = vmatpush1.msra.mxu0 %v263
        %325 = vmatprep.subr.mxu0 0.0
        %326 = vmatpush1.msra.mxu0 %v262
        %327 = vmatprep.subr.mxu0 0.0
        %328 = vmatpush2.msra.mxu0 0.0
        %329 = vmatprep.subr.mxu0 0.0
        %330 = vmatpush2.msra.mxu0 0.0
        %331 = vmatprep.subr.mxu0 0.0
        %332 = vmatpush2.msra.mxu0 0.0
        %333 = vmatprep.subr.mxu0 0.0
        %334 = vmatpush2.msra.mxu0 0.0
        %335 = vmatprep.subr.mxu0 0.0
        %336 = vmatpush2.msra.mxu0 0.0
        %337 = vmatprep.subr.mxu0 0.0
        %338 = vmatpush2.msra.mxu0 0.0
        %339 = vmatprep.subr.mxu0 0.0
        %340 = vmatpush2.msra.mxu0 0.0
        %341 = vmatprep.subr.mxu0 0.0
        %342 = vmatpush2.msra.mxu0 0.0
        %343 = vmatprep.subr.mxu0 0.0
        %344 = vmatpush2.msra.mxu0 0.0
        %345 = vmatprep.subr.mxu0 0.0
        %346 = vmatpush2.msra.mxu0 0.0
        %347 = vmatprep.subr.mxu0 0.0
        %348 = vmatpush2.msra.mxu0 0.0
        %349 = vmatprep.subr.mxu0 0.0
        %350 = vmatpush2.msra.mxu0 0.0
        %351 = vmatprep.subr.mxu0 0.0
        %352 = vmatpush2.msra.mxu0 0.0
        %353 = vmatprep.subr.mxu0 0.0
        %354 = vmatpush2.msra.mxu0 0.0
        %355 = vmatprep.subr.mxu0 0.0
        %356 = vmatpush2.msra.mxu0 0.0
        %357 = vmatprep.subr.mxu0 0.0
        %358 = vmatpush2.msra.mxu0 0.0
        %359 = vmatprep.mubr.f32.mxu0 0.0
        %360 = vmatmul.mubr.f32.gmra.mxu0 %v293
        %v361 = vpop.f32.mrf.mxu0
        %v362 = vadd.f32 0.0, %v361
        %v363 = vpop.f32.mrf.mxu0
        %364 = vmatprep.mubr.f32.mxu0 0.0
        %365 = vmatmul.mubr.f32.gmra.mxu0 %v294
        %v366 = vpop.f32.mrf.mxu0
        %v367 = vadd.f32 0.0, %v366
        %v368 = vpop.f32.mrf.mxu0
        %369 = vdwg.mxu0
        %370 = vst [vmem:[%s259] sm:$0xff] %v362
        %371 = vst [vmem:[%s259 + $0x8] sm:$0xff] %v367
        %s372 = sand.u32 %s137, 1
        %s373 = scalar_lea.sflag [#allocation6], %s372
        %s374 = sand.u32 %s137, 1
        %s375 = smul.addr %s374, 16
        %s376 = scalar_lea.vmem [#allocation12], %s375
        // Predicated region
        $region53: #{tpu_custom_call.1} parent=35 // pred_check
          %p377 = pneg %p147
        $region54: #{tpu_custom_call.1} parent=35 // pred_check_branch
          %379 = sbr.rel (%p377) target = $region56
        $region55: #{tpu_custom_call.1} parent=35 // pred_region
          %s380 = smul.u32 2, %s30
          %s382 = ssub.s32 256, 256
          %383 = vsyncadd %s373, %s382
          %s384 = smul.addr %s31, 2
          %s385 = sadd.s32 %s380, %s384
          %s386 = smul.addr %s385, 128
          %s387 = scalar_lea.hbm %s5, %s386
          %s388 = sshll.u32 %s376, 4
          %s389 = int_to_ptr.vmem [resolvable:$true] %s388
          %394 = dma.vmem_to_hbm [thread:$0]  %s389, 256, %s387, %s373, 128, 128, 8
        $region56: #{tpu_custom_call.1} parent=35 // pred_fallthru
          _
      $region36: #{tpu_custom_call.1} parent=5 // pred_fallthru
        _
      %p395 = scmp.le.s32.totalorder 2, %s21
      // Predicated region
      $region57: #{tpu_custom_call.1} parent=5 // pred_check
        %p396 = pneg %p395
      $region58: #{tpu_custom_call.1} parent=5 // pred_check_branch
        %398 = sbr.rel (%p396) target = $region60
      $region59: #{tpu_custom_call.1} parent=5 // pred_region
        %s399 = ssub.s32 %s21, 2
        // Predicated region
        $region61: #{tpu_custom_call.1} parent=59 // pred_check
          %p400 = pneg %p153
        $region62: #{tpu_custom_call.1} parent=59 // pred_check_branch
          %402 = sbr.rel (%p400) target = $region64
        $region63: #{tpu_custom_call.1} parent=59 // pred_region
          %s403 = sand.u32 %s138, 1
          %s404 = scalar_lea.sflag [#allocation6], %s403
          %s405 = sand.u32 %s138, 1
          %s406 = smul.addr %s405, 16
          %s407 = scalar_lea.vmem [#allocation12], %s406
          %408 = dma.done %s404, 256
        $region64: #{tpu_custom_call.1} parent=59 // pred_fallthru
          _
      $region60: #{tpu_custom_call.1} parent=5 // pred_fallthru
        _
    $region6: #{tpu_custom_call.1} parent=1 // loop_footer
      %s25 = sadd.s32 1, %s21
    $region7: #{tpu_custom_call.1} parent=1 // loop_footer_branch
      %20 = sbr.rel target = $region3
    $region8: #{tpu_custom_call.1} parent=1 // loop_exit
      _
    %409 = vsyncpa [#allocation5], 1
    %s410 = scalar_lea.sflag [#allocation5], 1
    %411 = vsyncpa %s410, 1
    %412 = vsyncpa [#allocation8], 1
    %413 = vsyncpa [#allocation11], 1
    %414 = vsyncpa [#allocation6], 1
    %s415 = scalar_lea.sflag [#allocation6], 1
    %416 = vsyncpa %s415, 1

</llo_original>
